<compile_context>
chip_gen: v7x
topology: tpu7x:2x2x1
jax: 0.10.0
libtpu: 0.0.40
codegen_flags: <defaults>
</compile_context>

<pallas_src>
import functools

import jax
import jax.numpy as jnp
from jax.experimental import pallas as pl
from jax.experimental.pallas import tpu as pltpu

GAMMA = 1.5
ALPHA = 0.25
_LANES = 128
# 4096 rows x 128 lanes x 4 B = 2 MiB per f32 input block.
_MAX_BLOCK_ROWS = 4096
_VMEM_LIMIT_BYTES = 48 * 1024 * 1024


def _round_up(x, m):
    return (x + m - 1) // m * m


def _focal_loss_kernel(pred_ref, true_ref, out_ref, *, gamma, alpha,
                       block_rows, full_rows, rem_lanes, last_block_row,
                       needs_mask):
    i = pl.program_id(0)
    n = pl.num_programs(0)

    @pl.when(i == 0)
    def _():
        out_ref[...] = jnp.zeros_like(out_ref)

    x = pred_ref[...].astype(jnp.float32)
    t = true_ref[...].astype(jnp.float32)

    # Shared transcendental: e = exp(-|x|) (single EUP exp), reused for both
    # the stable BCE log term and the sigmoid.
    e = jnp.exp(-jnp.abs(x))

    # Numerically-stable BCE with logits (reduction='none'):
    #   max(x, 0) - x*t + log(1 + exp(-|x|))
    bce = jnp.maximum(x, 0.0) - x * t + jnp.log1p(e)

    # sigmoid(x): s = sigmoid(|x|) = 1/(1+e), sign folded with one select.
    s = 1.0 / (1.0 + e)
    p = jnp.where(x >= 0.0, s, 1.0 - s)

    # Folded algebra (fewer VALU ops than the 1-t / 1-p / (1-t)*(1-p) forms):
    #   1 - p_t      = t + p - 2*t*p
    #   alpha_factor = (1-alpha) + (2*alpha-1)*t
    u = jnp.maximum(t + p - 2.0 * (t * p), 0.0)   # clamp: no NaN from pow
    alpha_factor = (1.0 - alpha) + (2.0 * alpha - 1.0) * t

    if gamma == 1.5:
        modulating_factor = u * jnp.sqrt(u)        # sqrt, not pow->exp/log
    elif gamma == 2.0:
        modulating_factor = u * u
    elif gamma == 1.0:
        modulating_factor = u
    elif gamma == 0.0:
        modulating_factor = jnp.ones_like(u)
    else:
        modulating_factor = u ** gamma

    loss = bce * alpha_factor * modulating_factor

    def _accumulate(l):
        # Lane-resident (8,128) partial sums: fold sublane-tile groups with
        # VALU adds only; the cross-lane reduce happens once in the wrapper.
        out_ref[...] += l.reshape(block_rows // 8, 8, _LANES).sum(axis=0)

    if needs_mask:
        # Only the LAST grid step can contain invalid elements (garbage rows
        # of the ragged last block + the zero lane-tail pad), so only that
        # step pays for the iota/compare/select masking.
        @pl.when(i == n - 1)
        def _():
            row = (jax.lax.broadcasted_iota(jnp.int32, loss.shape, 0)
                   + last_block_row)
            lane = jax.lax.broadcasted_iota(jnp.int32, loss.shape, 1)
            valid = (row < full_rows) | ((row == full_rows)
                                         & (lane < rem_lanes))
            _accumulate(jnp.where(valid, loss, 0.0))

        @pl.when(i != n - 1)
        def _():
            _accumulate(loss)
    else:
        _accumulate(loss)


def focal_loss(pred, true, gamma=GAMMA, alpha=ALPHA, reduction="mean",
               max_block_rows=_MAX_BLOCK_ROWS):
    """Focal loss with mean/sum reduction. pred/true: same shape, any layout.

    bf16 inputs are passed through unchanged (upcast happens in-register in
    the kernel), halving HBM traffic vs. upcasting in the wrapper.
    """
    assert pred.shape == true.shape
    assert max_block_rows % 8 == 0
    numel = pred.size
    assert numel > 0

    full_rows, rem = divmod(numel, _LANES)
    rows = full_rows + (1 if rem else 0)

    pred_flat = pred.reshape(-1)          # contiguous reshape: no copy
    true_flat = true.reshape(-1)
    if rem:
        # Tiny lane-tail pad to the next multiple of 128 only (NOT to the
        # full block grid); padded elements are masked out in-kernel.
        pad = _LANES - rem
        pred_flat = jnp.pad(pred_flat, (0, pad))
        true_flat = jnp.pad(true_flat, (0, pad))
    pred2d = pred_flat.reshape(rows, _LANES)
    true2d = true_flat.reshape(rows, _LANES)

    block_rows = min(max_block_rows, _round_up(rows, 8))
    n_blocks = -(-rows // block_rows)
    # Does the last block contain anything that is not a valid input element?
    needs_mask = (n_blocks * block_rows * _LANES) != numel

    kernel = functools.partial(
        _focal_loss_kernel,
        gamma=gamma,
        alpha=alpha,
        block_rows=block_rows,
        full_rows=full_rows,
        rem_lanes=rem,
        last_block_row=(n_blocks - 1) * block_rows,
        needs_mask=needs_mask,
    )

    partials = pl.pallas_call(
        kernel,
        out_shape=jax.ShapeDtypeStruct((8, _LANES), jnp.float32),
        grid_spec=pltpu.PrefetchScalarGridSpec(
            num_scalar_prefetch=0,
            grid=(n_blocks,),
            in_specs=[
                pl.BlockSpec((block_rows, _LANES), lambda i: (i, 0)),
                pl.BlockSpec((block_rows, _LANES), lambda i: (i, 0)),
            ],
            out_specs=pl.BlockSpec((8, _LANES), lambda i: (0, 0)),
        ),
        compiler_params=pltpu.CompilerParams(
            dimension_semantics=("arbitrary",),
            vmem_limit_bytes=_VMEM_LIMIT_BYTES,
        ),
    )(pred2d, true2d)

    total = jnp.sum(partials)
    if reduction == "mean":
        return total / numel
    elif reduction == "sum":
        return total
    else:
        # TODO(synk): reduction='none' (elementwise output) not implemented;
        # the YOLO use-case wraps BCEWithLogitsLoss(reduction='mean').
        raise NotImplementedError("reduction must be 'mean' or 'sum'")


def focal_loss_ref(pred, true, gamma=GAMMA, alpha=ALPHA):
    x = pred.astype(jnp.float32)
    t = true.astype(jnp.float32)
    bce = jnp.maximum(x, 0.0) - x * t + jnp.log1p(jnp.exp(-jnp.abs(x)))
    p = jax.nn.sigmoid(x)
    p_t = t * p + (1.0 - t) * (1.0 - p)
    af = t * alpha + (1.0 - t) * (1.0 - alpha)
    mf = (1.0 - p_t) ** gamma
    return jnp.mean(bce * af * mf)


if __name__ == "__main__":
    key = jax.random.PRNGKey(0)
    k1, k2, k3, k4 = jax.random.split(key, 4)

    # YOLO-style NCHW logits: batch=2, channels=4, 16x16 grid.
    pred = jax.random.normal(k1, (2, 4, 16, 16), dtype=jnp.float32) * 2.0
    true = (jax.random.uniform(k2, (2, 4, 16, 16)) > 0.7).astype(jnp.float32)
    out = jax.block_until_ready(focal_loss(pred, true))
    ref = focal_loss_ref(pred, true)
    assert jnp.allclose(out, ref, rtol=1e-5, atol=1e-6), (out, ref)

    # Non-128-divisible shape: exercises the lane-tail pad + in-kernel mask.
    pred_odd = jax.random.normal(k3, (3, 5, 7, 9), dtype=jnp.float32)
    true_odd = (jax.random.uniform(k4, (3, 5, 7, 9)) > 0.5).astype(jnp.float32)
    out_odd = jax.block_until_ready(focal_loss(pred_odd, true_odd))
    ref_odd = focal_loss_ref(pred_odd, true_odd)
    assert jnp.allclose(out_odd, ref_odd, rtol=1e-5, atol=1e-6), (out_odd, ref_odd)

    # Small block override: exercises multi-block accumulation + the gated
    # ragged-last-block mask path.
    pred_mb = jax.random.normal(k1, (4, 4, 24, 24), dtype=jnp.float32)
    true_mb = (jax.random.uniform(k2, (4, 4, 24, 24)) > 0.6).astype(jnp.float32)
    out_mb = jax.block_until_ready(focal_loss(pred_mb, true_mb, max_block_rows=16))
    ref_mb = focal_loss_ref(pred_mb, true_mb)
    assert jnp.allclose(out_mb, ref_mb, rtol=1e-5, atol=1e-6), (out_mb, ref_mb)

    # bf16 passthrough: inputs stay bf16 in HBM, upcast happens in-register.
    pred_bf = pred.astype(jnp.bfloat16)
    true_bf = true.astype(jnp.bfloat16)
    out_bf = jax.block_until_ready(focal_loss(pred_bf, true_bf))
    ref_bf = focal_loss_ref(pred_bf, true_bf)
    assert jnp.allclose(out_bf, ref_bf, rtol=1e-4, atol=1e-5), (out_bf, ref_bf)

    print("KERNEL_OK")
</pallas_src>

<mosaic_0001>
module attributes {stable_mosaic.version = 11 : i64} {
  func.func @_focal_loss_kernel(%arg0: i32, %arg1: memref<16x128xf32, #tpu.memory_space<vmem>>, %arg2: memref<16x128xf32, #tpu.memory_space<vmem>>, %arg3: memref<8x128xf32, #tpu.memory_space<vmem>>) attributes {dimension_semantics = [#tpu.dimension_semantics<arbitrary>], iteration_bounds = array<i64: 1>, scalar_prefetch = 0 : i64, scratch_operands = 0 : i64, tpu.core_type = #tpu.core_type<tc>, window_params = [{transform_indices = @transform_0, window_bounds = array<i64: 16, 128>}, {transform_indices = @transform_1, window_bounds = array<i64: 16, 128>}, {pipeline_mode = #tpu.pipeline_mode<synchronous>, transform_indices = @transform_2, window_bounds = array<i64: 8, 128>}]} {
    %c0_i32 = arith.constant 0 : i32
    %0 = arith.cmpi eq, %arg0, %c0_i32 : i32
    %1 = arith.extui %0 : i1 to i32
    %c0_i32_0 = arith.constant 0 : i32
    %2 = arith.cmpi ne, %1, %c0_i32_0 : i32
    scf.if %2 {
      %cst_18 = arith.constant 0.000000e+00 : f32
      %44 = vector.broadcast %cst_18 : f32 to vector<8x128xf32>
      %c0_19 = arith.constant 0 : index
      %c0_20 = arith.constant 0 : index
      %45 = vector.load %arg3[%c0_19, %c0_20] : memref<8x128xf32, #tpu.memory_space<vmem>>, vector<8x128xf32>
      tpu.vector_store %arg3[%c0_19, %c0_20], %44 {strides = array<i32>} : memref<8x128xf32, #tpu.memory_space<vmem>>, vector<8x128xf32>,
    } else {
    }
    %c0 = arith.constant 0 : index
    %c0_1 = arith.constant 0 : index
    %3 = vector.load %arg1[%c0, %c0_1] : memref<16x128xf32, #tpu.memory_space<vmem>>, vector<16x128xf32>
    %c0_2 = arith.constant 0 : index
    %c0_3 = arith.constant 0 : index
    %4 = vector.load %arg2[%c0_2, %c0_3] : memref<16x128xf32, #tpu.memory_space<vmem>>, vector<16x128xf32>
    %5 = math.absf %3 : vector<16x128xf32>
    %cst = arith.constant 0.000000e+00 : f32
    %6 = vector.broadcast %cst : f32 to vector<16x128xf32>
    %7 = arith.subf %6, %5 : vector<16x128xf32>
    %8 = math.exp %7 : vector<16x128xf32>
    %cst_4 = arith.constant 0.000000e+00 : f32
    %9 = vector.broadcast %cst_4 : f32 to vector<16x128xf32>
    %10 = arith.maximumf %3, %9 : vector<16x128xf32>
    %11 = arith.mulf %3, %4 : vector<16x128xf32>
    %12 = arith.subf %10, %11 : vector<16x128xf32>
    %13 = math.log1p %8 : vector<16x128xf32>
    %14 = arith.addf %12, %13 : vector<16x128xf32>
    %cst_5 = arith.constant 1.000000e+00 : f32
    %15 = vector.broadcast %cst_5 : f32 to vector<16x128xf32>
    %16 = arith.addf %15, %8 : vector<16x128xf32>
    %cst_6 = arith.constant 1.000000e+00 : f32
    %17 = vector.broadcast %cst_6 : f32 to vector<16x128xf32>
    %18 = arith.divf %17, %16 : vector<16x128xf32>
    %cst_7 = arith.constant 0.000000e+00 : f32
    %19 = vector.broadcast %cst_7 : f32 to vector<16x128xf32>
    %20 = arith.cmpf oge, %3, %19 : vector<16x128xf32>
    %cst_8 = arith.constant 1.000000e+00 : f32
    %21 = vector.broadcast %cst_8 : f32 to vector<16x128xf32>
    %22 = arith.subf %21, %18 : vector<16x128xf32>
    %23 = arith.select %20, %18, %22 : vector<16x128xi1>, vector<16x128xf32>
    %24 = arith.addf %4, %23 : vector<16x128xf32>
    %25 = arith.mulf %4, %23 : vector<16x128xf32>
    %cst_9 = arith.constant 2.000000e+00 : f32
    %26 = vector.broadcast %cst_9 : f32 to vector<16x128xf32>
    %27 = arith.mulf %26, %25 : vector<16x128xf32>
    %28 = arith.subf %24, %27 : vector<16x128xf32>
    %cst_10 = arith.constant 0.000000e+00 : f32
    %29 = vector.broadcast %cst_10 : f32 to vector<16x128xf32>
    %30 = arith.maximumf %28, %29 : vector<16x128xf32>
    %cst_11 = arith.constant -5.000000e-01 : f32
    %31 = vector.broadcast %cst_11 : f32 to vector<16x128xf32>
    %32 = arith.mulf %31, %4 : vector<16x128xf32>
    %cst_12 = arith.constant 7.500000e-01 : f32
    %33 = vector.broadcast %cst_12 : f32 to vector<16x128xf32>
    %34 = arith.addf %33, %32 : vector<16x128xf32>
    %35 = math.sqrt %30 : vector<16x128xf32>
    %36 = arith.mulf %30, %35 : vector<16x128xf32>
    %37 = arith.mulf %14, %34 : vector<16x128xf32>
    %38 = arith.mulf %37, %36 : vector<16x128xf32>
    %c0_13 = arith.constant 0 : index
    %c0_14 = arith.constant 0 : index
    %39 = vector.load %arg3[%c0_13, %c0_14] : memref<8x128xf32, #tpu.memory_space<vmem>>, vector<8x128xf32>
    %40 = vector.shape_cast %38 : vector<16x128xf32> to vector<2x8x128xf32>
    %cst_15 = arith.constant dense<0.000000e+00> : vector<8x128xf32>
    %41 = vector.multi_reduction <add>, %40, %cst_15 [0] : vector<2x8x128xf32> to vector<8x128xf32>
    %42 = arith.addf %39, %41 : vector<8x128xf32>
    %c0_16 = arith.constant 0 : index
    %c0_17 = arith.constant 0 : index
    %43 = vector.load %arg3[%c0_16, %c0_17] : memref<8x128xf32, #tpu.memory_space<vmem>>, vector<8x128xf32>
    tpu.vector_store %arg3[%c0_16, %c0_17], %42 {strides = array<i32>} : memref<8x128xf32, #tpu.memory_space<vmem>>, vector<8x128xf32>,
    return
  }
  func.func @transform_0(%arg0: i32) -> (i32, i32) {
    %c0_i32 = arith.constant 0 : i32
    %c0_i32_0 = arith.constant 0 : i32
    return %arg0, %c0_i32 : i32, i32
  }
  func.func @transform_1(%arg0: i32) -> (i32, i32) {
    %c0_i32 = arith.constant 0 : i32
    %c0_i32_0 = arith.constant 0 : i32
    return %arg0, %c0_i32 : i32, i32
  }
  func.func @transform_2(%arg0: i32) -> (i32, i32) {
    %c0_i32 = arith.constant 0 : i32
    %c0_i32_0 = arith.constant 0 : i32
    %c0_i32_1 = arith.constant 0 : i32
    return %c0_i32, %c0_i32_0 : i32, i32
  }
}

</mosaic_0001>

<llo_original>
// kernel: tpu_custom_call.1
$region0: #{tpu_custom_call.1}
  #allocation0 [shape = 'u32[]', space=smem, size = 0x4, offset = 0x4, fixed_abs, tag = 'smem constant byte address 0x4 - core index']
  #allocation1 [shape = 'u32[144,128]{1,0:T(1,128)}', space=vmem, size = 0x12000, scoped, tag = 'internal scratch']
  %s0 = inlined_call_operand.hbm [shape: f32[16,128], index: 0, kind: input, shape index: {}]
  %s1 = inlined_call_operand.hbm [shape: f32[16,128], index: 1, kind: input, shape index: {}]
  %s2 = inlined_call_operand.hbm [shape: f32[8,128], index: 2, kind: output, shape index: {}]
  %s3 = sld [smem:[#allocation0]]
  $region30: #{tpu_custom_call.1} parent=0
    _
  %s5 = ssub.s32 1, %s3
  %s6 = scalar_select 0, %s5, %s3
  $region1: #{tpu_custom_call.1} parent=0
    #allocation2 [shape = 'u8[8192]{0}', space=vmem, size = 0x2000, scoped, tag = 'input window, operand 0, single buffered']
    #allocation3 [shape = 's32[1]{0}', space=sflag, size = 0x4, scoped, tag = 'scoped memory for tpu_custom_call.1']
    #allocation4 [shape = 's32[1]{0}', space=sflag, size = 0x4, scoped, tag = 'scoped memory for tpu_custom_call.1']
    #allocation5 [shape = 'u8[8192]{0}', space=vmem, size = 0x2000, scoped, tag = 'input window, operand 1, single buffered']
    #allocation6 [shape = 's32[1]{0}', space=sflag, size = 0x4, scoped, tag = 'scoped memory for tpu_custom_call.1']
    #allocation7 [shape = 'u8[4096]{0}', space=vmem, size = 0x1000, scoped, tag = 'output window, operand 0, single buffered']
    %7 = vsyncpa [#allocation3], 0
    %8 = vsyncpa [#allocation6], 0
    %9 = vsyncpa [#allocation4], 0
    // Predicated region
    $region2: #{tpu_custom_call.1} parent=1 // pred_check
      _
    $region3: #{tpu_custom_call.1} parent=1 // pred_check_branch
      %11 = sbr.rel (0) target = $region5
    $region4: #{tpu_custom_call.1} parent=1 // pred_region
      %s13 = ssub.s32 256, 256
      %14 = vsyncadd [#allocation3], %s13
      %s15 = sshll.u32 [#allocation2], 4
      %s16 = int_to_ptr.vmem [resolvable:$true] %s15
      %21 = dma.hbm_to_vmem [thread:$0]  %s0, 256, %s16, [#allocation3], 128, 128, 8
    $region5: #{tpu_custom_call.1} parent=1 // pred_fallthru
      _
    // Predicated region
    $region6: #{tpu_custom_call.1} parent=1 // pred_check
      _
    $region7: #{tpu_custom_call.1} parent=1 // pred_check_branch
      %23 = sbr.rel (0) target = $region9
    $region8: #{tpu_custom_call.1} parent=1 // pred_region
      %s25 = ssub.s32 256, 256
      %26 = vsyncadd [#allocation6], %s25
      %s27 = sshll.u32 [#allocation5], 4
      %s28 = int_to_ptr.vmem [resolvable:$true] %s27
      %33 = dma.hbm_to_vmem [thread:$0]  %s1, 256, %s28, [#allocation6], 128, 128, 8
    $region9: #{tpu_custom_call.1} parent=1 // pred_fallthru
      _
    // Predicated region
    $region10: #{tpu_custom_call.1} parent=1 // pred_check
      _
    $region11: #{tpu_custom_call.1} parent=1 // pred_check_branch
      %35 = sbr.rel (0) target = $region13
    $region12: #{tpu_custom_call.1} parent=1 // pred_region
      %36 = dma.done [#allocation3], 256
    $region13: #{tpu_custom_call.1} parent=1 // pred_fallthru
      _
    // Predicated region
    $region14: #{tpu_custom_call.1} parent=1 // pred_check
      _
    $region15: #{tpu_custom_call.1} parent=1 // pred_check_branch
      %38 = sbr.rel (0) target = $region17
    $region16: #{tpu_custom_call.1} parent=1 // pred_region
      %39 = dma.done [#allocation6], 256
    $region17: #{tpu_custom_call.1} parent=1 // pred_fallthru
      _
    %p40 = scmp.eq.s32.totalorder 0, 0
    // Predicated region
    $region18: #{tpu_custom_call.1} parent=1 // pred_check
      %p41 = pneg %p40
    $region19: #{tpu_custom_call.1} parent=1 // pred_check_branch
      %43 = sbr.rel (%p41) target = $region21
    $region20: #{tpu_custom_call.1} parent=1 // pred_region
      %44 = vst [vmem:[#allocation7] sm:$0xff] 0.0
    $region21: #{tpu_custom_call.1} parent=1 // pred_fallthru
      _
    %v45 = vld [vmem:[#allocation2] sm:$0xff]
    %v46 = vld [vmem:[#allocation2 + $0x8] sm:$0xff]
    %v47 = vld [vmem:[#allocation5] sm:$0xff]
    %v48 = vld [vmem:[#allocation5 + $0x8] sm:$0xff]
    %v49 = vand.u32 2147483647, %v45
    %v50 = vand.u32 2147483647, %v46
    %v51 = vsub.f32 0.0, %v49
    %v52 = vsub.f32 0.0, %v50
    %v53 = vmul.f32 %v51, 1.442695
    %v54 = vpow.pop %v53
    %v55 = vmul.f32 %v52, 1.442695
    %v56 = vpow.pop %v55
    %v57 = vmax.f32 %v45, 0.0
    %v58 = vmax.f32 %v46, 0.0
    %v59 = vmul.f32 %v45, %v47
    %v60 = vmul.f32 %v46, %v48
    %v61 = vsub.f32 %v57, %v59
    %v62 = vsub.f32 %v58, %v60
    %v63 = vadd.f32 %v54, 1.0
    %v64 = vlog2.pop %v63
    %v65 = vmul.f32 %v64, 0.6931472
    %v66 = vmul.f32 -0.5, %v54
    %v67 = vadd.f32 %v66, 1.0
    %v68 = vmul.f32 %v67, %v54
    %v69 = vand.u32 2147483647, %v54
    %vm70 = vcmp.lt.f32.partialorder %v69, 0.0004427343
    %v71 = vsel %vm70, %v68, %v65
    %v72 = vadd.f32 %v56, 1.0
    %v73 = vlog2.pop %v72
    %v74 = vmul.f32 %v73, 0.6931472
    %v75 = vmul.f32 -0.5, %v56
    %v76 = vadd.f32 %v75, 1.0
    %v77 = vmul.f32 %v76, %v56
    %v78 = vand.u32 2147483647, %v56
    %vm79 = vcmp.lt.f32.partialorder %v78, 0.0004427343
    %v80 = vsel %vm79, %v77, %v74
    %v81 = vadd.f32 %v61, %v71
    %v82 = vadd.f32 %v62, %v80
    %v83 = vadd.f32 %v54, 1.0
    %v84 = vadd.f32 %v56, 1.0
    %v85 = vrcp.pop %v83
    %v86 = vmul.f32 1.0, %v85
    %v87 = vrcp.pop %v84
    %v88 = vmul.f32 1.0, %v87
    %vm89 = vcmp.ge.f32.partialorder %v45, 0.0
    %vm90 = vcmp.ge.f32.partialorder %v46, 0.0
    %v91 = vsub.f32 1.0, %v86
    %v92 = vsub.f32 1.0, %v88
    %v93 = vsel %vm89, %v86, %v91
    %v94 = vsel %vm90, %v88, %v92
    %v95 = vadd.f32 %v47, %v93
    %v96 = vadd.f32 %v48, %v94
    %v97 = vmul.f32 %v47, %v93
    %v98 = vmul.f32 %v48, %v94
    %v99 = vmul.f32 %v97, 2.0
    %v100 = vmul.f32 %v98, 2.0
    %v101 = vsub.f32 %v95, %v99
    %v102 = vsub.f32 %v96, %v100
    %v103 = vmax.f32 %v101, 0.0
    %v104 = vmax.f32 %v102, 0.0
    %v105 = vmul.f32 %v47, -0.5
    %v106 = vmul.f32 %v48, -0.5
    %v107 = vadd.f32 %v105, 0.75
    %v108 = vadd.f32 %v106, 0.75
    %v109 = vrsqrt.pop %v103
    %v110 = vmul.f32 %v103, %v109
    %vm111 = vcmp.eq.f32.partialorder %v103, inf
    %v112 = vsel %vm111, %v103, %v110
    %vm113 = vcmp.eq.f32.partialorder %v103, 0.0
    %v114 = vand.u32 %v103, 2147483648
    %v115 = vsel %vm113, %v114, %v112
    %v116 = vrsqrt.pop %v104
    %v117 = vmul.f32 %v104, %v116
    %vm118 = vcmp.eq.f32.partialorder %v104, inf
    %v119 = vsel %vm118, %v104, %v117
    %vm120 = vcmp.eq.f32.partialorder %v104, 0.0
    %v121 = vand.u32 %v104, 2147483648
    %v122 = vsel %vm120, %v121, %v119
    %v123 = vmul.f32 %v103, %v115
    %v124 = vmul.f32 %v104, %v122
    %v125 = vmul.f32 %v81, %v107
    %v126 = vmul.f32 %v82, %v108
    %v127 = vmul.f32 %v125, %v123
    %v128 = vmul.f32 %v126, %v124
    %v129 = vld [vmem:[#allocation7] sm:$0xff]
    %v130 = vadd.f32 %v127, %v128
    %v131 = vadd.f32 %v129, %v130
    %132 = vst [vmem:[#allocation7] sm:$0xff] %v131
    // Predicated region
    $region22: #{tpu_custom_call.1} parent=1 // pred_check
      _
    $region23: #{tpu_custom_call.1} parent=1 // pred_check_branch
      %134 = sbr.rel (0) target = $region25
    $region24: #{tpu_custom_call.1} parent=1 // pred_region
      %s136 = ssub.s32 128, 128
      %137 = vsyncadd [#allocation4], %s136
      %s139 = sshll.u32 [#allocation7], 4
      %s140 = int_to_ptr.vmem [resolvable:$true] %s139
      %142 = dma.vmem_to_hbm [thread:$0]  %s140, 128, %s2, [#allocation4]
    $region25: #{tpu_custom_call.1} parent=1 // pred_fallthru
      _
    // Predicated region
    $region26: #{tpu_custom_call.1} parent=1 // pred_check
      _
    $region27: #{tpu_custom_call.1} parent=1 // pred_check_branch
      %144 = sbr.rel (0) target = $region29
    $region28: #{tpu_custom_call.1} parent=1 // pred_region
      %145 = dma.done [#allocation4], 128
    $region29: #{tpu_custom_call.1} parent=1 // pred_fallthru
      _
    %146 = vsyncpa [#allocation3], 1
    %147 = vsyncpa [#allocation6], 1
    %148 = vsyncpa [#allocation4], 1

</llo_original>
